<compile_context>
chip_gen: v7x
topology: tpu7x:2x2x1
jax: 0.10.0
libtpu: 0.0.40
codegen_flags: <defaults>
</compile_context>

<pallas_src>
import functools
import math

import jax
import jax.numpy as jnp
import numpy as np
from jax import lax
from jax.experimental import pallas as pl
from jax.experimental.pallas import tpu as pltpu


def _phase_offsets(k, s, p):
    """Padded-window offsets needed by the sub-pixel decomposition along one spatial dim."""
    deltas = sorted({(d + p - kk) // s
                     for d in range(s) for kk in range(k)
                     if (d + p - kk) % s == 0})
    if not deltas:
        raise ValueError(
            f"sub-pixel decomposition has no contributing taps for k={k}, s={s}, p={p}")
    lo, hi = deltas[0], deltas[-1]
    return -lo, hi - lo + 1


def _fold_tconv_weight(w_iohw, s, p, n_off_h, n_off_w, pad_h, pad_w):
    """Fold ConvTranspose2d weight (C_in, C_out, KH, KW) into the sub-pixel matmul weight.

    Result shape: (s*s*C_out, n_off_h*n_off_w*C_in); row = (dh*s+dw)*C_out + co,
    column = (roff*n_off_w + coff)*C_in + ci.  Built once at trace time (wrapper glue).
    """
    C_in, C_out, KH, KW = w_iohw.shape
    wm = jnp.zeros((s * s * C_out, n_off_h * n_off_w * C_in), w_iohw.dtype)
    for dh in range(s):
        for kh in range(KH):
            if (dh + p - kh) % s != 0:
                continue
            roff = pad_h + (dh + p - kh) // s
            for dw in range(s):
                for kw in range(KW):
                    if (dw + p - kw) % s != 0:
                        continue
                    coff = pad_w + (dw + p - kw) // s
                    blk = w_iohw[:, :, kh, kw].T          # (C_out, C_in)
                    r0 = (dh * s + dw) * C_out
                    c0 = (roff * n_off_w + coff) * C_in
                    wm = wm.at[r0:r0 + C_out, c0:c0 + C_in].set(blk)
    return wm


def _default_batch_block(n_batch):
    """Batch elements per grid step: whole batch on 1-TC chips (v5e/v6e), half on v7x (2 TCs)."""
    try:
        kind = jax.devices()[0].device_kind.lower()
    except Exception:  # pragma: no cover - defensive; fall back to a universally safe split
        kind = ""
    if n_batch >= 2 and "7" in kind:          # keep >=2 "parallel" grid steps for the 2 TCs
        return max(1, n_batch // 2)
    return n_batch


def _tconv_matmul_kernel(p_ref, w_ref, o_ref):
    """One grid step = one batch group.  Body is a single MXU contraction.

    p_ref: (K_pad, BB*H*W)   lane-dense im2col patches (built in the wrapper)
    w_ref: (M,     K_pad)    folded sub-pixel weight (grid-invariant block)
    o_ref: (M,     BB*H*W)   lane-dense phase output
    """
    o_ref[...] = jnp.dot(w_ref[...], p_ref[...],
                         preferred_element_type=jnp.float32).astype(o_ref.dtype)


def conv_transpose2d_relu_pallas(x_nchw, w_iohw, *, stride=2, use_bf16=False, batch_block=None):
    """y = conv_transpose2d(relu(x)), stride=s, padding=(k-s)//2, dilation=1, no bias.

    x_nchw: (N, C_in, H, W) float32
    w_iohw: (C_in, C_out, KH, KW) float32   (PyTorch ConvTranspose2d weight layout)
    returns (N, C_out, s*H, s*W)
    """
    N, C_in, H, W = x_nchw.shape
    C_in_w, C_out, KH, KW = w_iohw.shape
    assert C_in == C_in_w and KH == KW
    k, s = KH, stride
    p = (k - 1 + 1 - s) // 2                   # module's padding rule
    assert (k - s) % 2 == 0, "sub-pixel decomposition assumes (k - s) even -> output = s*H"
    # TODO(synk): dilation != 1 / output_padding not handled (module defaults only).

    pad_h, n_off_h = _phase_offsets(k, s, p)
    pad_w, n_off_w = _phase_offsets(k, s, p)

    HW = H * W
    M = s * s * C_out
    K = n_off_h * n_off_w * C_in
    sub = 16 if use_bf16 else 8                # pad contraction dim to a sublane multiple
    K_pad = ((K + sub - 1) // sub) * sub

    if batch_block is None:
        batch_block = _default_batch_block(N)
    BB = max(1, min(int(batch_block), N))
    G = -(-N // BB)                            # grid steps (cdiv)
    N_pad = G * BB

    operand_dtype = jnp.bfloat16 if use_bf16 else x_nchw.dtype

    # ---- wrapper glue (trace-time / fused by XLA): relu -> zero-pad -> im2col ----------------
    # relu(0) == 0, so ReLU commutes with the zero padding.  ReLU stays in f32 (v5e-friendly);
    # the single cast to bf16 (if any) happens once here, not per grid step.
    x_relu = jnp.maximum(x_nchw, 0.0)
    if N_pad != N:
        x_relu = jnp.pad(x_relu, ((0, N_pad - N), (0, 0), (0, 0), (0, 0)))
    x_p = jnp.pad(x_relu, ((0, 0), (0, 0),
                           (pad_h, n_off_h - 1 - pad_h),
                           (pad_w, n_off_w - 1 - pad_w)))
    wins = [x_p[:, :, r:r + H, c:c + W]                        # (N_pad, C_in, H, W) per offset
            for r in range(n_off_h) for c in range(n_off_w)]
    patches = jnp.stack(wins, axis=1).reshape(N_pad, K, HW)    # rows ordered (off, ci)
    patches = jnp.pad(patches, ((0, 0), (0, K_pad - K), (0, 0)))
    # group BB batch elements per grid step; lane axis = BB*H*W (batch-major within lanes)
    patches = patches.reshape(G, BB, K_pad, HW).transpose(0, 2, 1, 3).reshape(G, K_pad, BB * HW)
    patches = patches.astype(operand_dtype)

    w_mat = _fold_tconv_weight(w_iohw, s, p, n_off_h, n_off_w, pad_h, pad_w)
    w_mat = jnp.pad(w_mat, ((0, 0), (0, K_pad - K))).astype(operand_dtype)

    # ---- Pallas: one MXU contraction per batch group ------------------------------------------
    # Per-step VMEM: (K_pad + 2*M) * BB*HW * bytes + weight  ~ a few hundred KB -> fits every chip
    # (v7x's 64 MiB included) with double buffering; budget set explicitly below.
    out = pl.pallas_call(
        _tconv_matmul_kernel,
        out_shape=jax.ShapeDtypeStruct((G, M, BB * HW), x_nchw.dtype),
        grid_spec=pltpu.PrefetchScalarGridSpec(
            num_scalar_prefetch=0,
            grid=(G,),
            in_specs=[
                pl.BlockSpec((pl.Squeezed(), K_pad, BB * HW), lambda g: (g, 0, 0)),
                pl.BlockSpec((M, K_pad), lambda g: (0, 0)),       # weight stays resident
            ],
            out_specs=pl.BlockSpec((pl.Squeezed(), M, BB * HW), lambda g: (g, 0, 0)),
        ),
        compiler_params=pltpu.CompilerParams(
            dimension_semantics=("parallel",),
            vmem_limit_bytes=32 * 1024 * 1024,
        ),
    )(patches, w_mat)

    # Depth-to-space (wrapper glue; consumers that accept the phase layout can skip this).
    # out[g, (dh*s+dw)*C_out + co, bb*HW + m*W + q] -> y[g*BB+bb, co, s*m+dh, s*q+dw]
    y = out.reshape(G, s, s, C_out, BB, H, W)
    y = jnp.transpose(y, (0, 4, 3, 5, 1, 6, 2))
    y = y.reshape(N_pad, C_out, s * H, s * W)
    return y[:N]


def _reference(x_nchw, w_iohw, stride=2):
    """Pure-JAX reference: relu -> ConvTranspose2d (PyTorch semantics) via lhs-dilated conv."""
    C_in, C_out, KH, KW = w_iohw.shape
    k, s = KH, stride
    p = (k - 1 + 1 - s) // 2
    y = jnp.maximum(x_nchw, 0.0)
    w_oihw = jnp.transpose(w_iohw[:, :, ::-1, ::-1], (1, 0, 2, 3))
    return lax.conv_general_dilated(
        y, w_oihw,
        window_strides=(1, 1),
        padding=[(k - 1 - p, k - 1 - p), (k - 1 - p, k - 1 - p)],
        lhs_dilation=(s, s),
        rhs_dilation=(1, 1),
        dimension_numbers=("NCHW", "OIHW", "NCHW"))


if __name__ == "__main__":
    # Module config: n_in=4, n_out=8, kernel_size=4, stride=2 (default), dilation=1,
    # bias=False, activation=ReLU, norm=None, sn=False  ->  2x spatial upsampling.
    N, C_in, H, W = 2, 4, 16, 16
    C_out, K, S = 8, 4, 2

    key = jax.random.PRNGKey(0)
    kx, kw = jax.random.split(key)
    x = jax.random.normal(kx, (N, C_in, H, W), dtype=jnp.float32)
    fan_in = C_in * K * K
    bound = 1.0 / math.sqrt(fan_in)
    w = jax.random.uniform(kw, (C_in, C_out, K, K),
                           minval=-bound, maxval=bound, dtype=jnp.float32)

    ref = jax.block_until_ready(_reference(x, w, stride=S))

    # f32 path, 2 grid steps (covers the >=2-parallel-steps layout used on v7x).
    out_f32 = jax.block_until_ready(
        conv_transpose2d_relu_pallas(x, w, stride=S, use_bf16=False, batch_block=1))
    if out_f32.shape != (N, C_out, S * H, S * W):
        raise AssertionError(f"bad output shape {out_f32.shape}")
    if not np.allclose(np.asarray(out_f32), np.asarray(ref), rtol=1e-4, atol=1e-4):
        raise AssertionError("Pallas ConvTranspose2d (f32) mismatch vs reference")

    # bf16-operand path (default choice for v6e/v7x), whole batch in one grid step.
    out_bf16 = jax.block_until_ready(
        conv_transpose2d_relu_pallas(x, w, stride=S, use_bf16=True, batch_block=N))
    if not np.allclose(np.asarray(out_bf16), np.asarray(ref), rtol=2e-2, atol=2e-2):
        raise AssertionError("Pallas ConvTranspose2d (bf16 operands) mismatch vs reference")

    print("KERNEL_OK")
</pallas_src>

<mosaic_0001>
module attributes {stable_mosaic.version = 11 : i64} {
  func.func @_tconv_matmul_kernel(%arg0: i32, %arg1: memref<1x40x256xf32, #tpu.memory_space<vmem>>, %arg2: memref<32x40xf32, #tpu.memory_space<vmem>>, %arg3: memref<1x32x256xf32, #tpu.memory_space<vmem>>) attributes {dimension_semantics = [#tpu.dimension_semantics<parallel>], iteration_bounds = array<i64: 2>, scalar_prefetch = 0 : i64, scratch_operands = 0 : i64, tpu.core_type = #tpu.core_type<tc>, window_params = [{transform_indices = @transform_0, window_bounds = array<i64: 1, 40, 256>}, {pipeline_mode = #tpu.pipeline_mode<synchronous>, transform_indices = @transform_1, window_bounds = array<i64: 32, 40>}, {transform_indices = @transform_2, window_bounds = array<i64: 1, 32, 256>}]} {
    %c0 = arith.constant 0 : index
    %c0_0 = arith.constant 0 : index
    %0 = vector.load %arg2[%c0, %c0_0] : memref<32x40xf32, #tpu.memory_space<vmem>>, vector<32x40xf32>
    %c0_1 = arith.constant 0 : index
    %c0_2 = arith.constant 0 : index
    %c0_3 = arith.constant 0 : index
    %1 = vector.load %arg1[%c0_1, %c0_2, %c0_3] : memref<1x40x256xf32, #tpu.memory_space<vmem>>, vector<1x40x256xf32>
    %2 = vector.shape_cast %1 : vector<1x40x256xf32> to vector<40x256xf32>
    %cst = arith.constant dense<0.000000e+00> : vector<32x256xf32>
    %3 = tpu.matmul %0, %2, %cst {dimension_numbers = #tpu.dot_dimension_numbers<[1], [0], [0], [1], [0, 0, 1, 1], [], []>} : vector<32x40xf32>, vector<40x256xf32>, vector<32x256xf32> -> vector<32x256xf32>
    %c0_4 = arith.constant 0 : index
    %c0_5 = arith.constant 0 : index
    %c0_6 = arith.constant 0 : index
    %4 = vector.load %arg3[%c0_4, %c0_5, %c0_6] : memref<1x32x256xf32, #tpu.memory_space<vmem>>, vector<1x32x256xf32>
    %5 = vector.shape_cast %4 : vector<1x32x256xf32> to vector<32x256xf32>
    %6 = vector.shape_cast %3 : vector<32x256xf32> to vector<1x32x256xf32>
    tpu.vector_store %arg3[%c0_4, %c0_5, %c0_6], %6 {strides = array<i32>} : memref<1x32x256xf32, #tpu.memory_space<vmem>>, vector<1x32x256xf32>,
    return
  }
  func.func @transform_0(%arg0: i32) -> (i32, i32, i32) {
    %c0_i32 = arith.constant 0 : i32
    %c0_i32_0 = arith.constant 0 : i32
    %c0_i32_1 = arith.constant 0 : i32
    return %arg0, %c0_i32, %c0_i32_0 : i32, i32, i32
  }
  func.func @transform_1(%arg0: i32) -> (i32, i32) {
    %c0_i32 = arith.constant 0 : i32
    %c0_i32_0 = arith.constant 0 : i32
    %c0_i32_1 = arith.constant 0 : i32
    return %c0_i32, %c0_i32_0 : i32, i32
  }
  func.func @transform_2(%arg0: i32) -> (i32, i32, i32) {
    %c0_i32 = arith.constant 0 : i32
    %c0_i32_0 = arith.constant 0 : i32
    %c0_i32_1 = arith.constant 0 : i32
    return %arg0, %c0_i32, %c0_i32_0 : i32, i32, i32
  }
}

</mosaic_0001>

<llo_original>
// kernel: tpu_custom_call.1
$region0: #{tpu_custom_call.1}
  #allocation0 [shape = 'u32[]', space=smem, size = 0x4, offset = 0x4, fixed_abs, tag = 'smem constant byte address 0x4 - core index']
  #allocation1 [shape = 'u32[144,128]{1,0:T(1,128)}', space=vmem, size = 0x12000, scoped, tag = 'internal scratch']
  %s0 = inlined_call_operand.hbm [shape: f32[2,40,256], index: 0, kind: input, shape index: {}]
  %s1 = inlined_call_operand.hbm [shape: f32[32,40], index: 1, kind: input, shape index: {}]
  %s2 = inlined_call_operand.hbm [shape: f32[2,32,256], index: 2, kind: output, shape index: {}]
  %s3 = sld [smem:[#allocation0]]
  $region49: #{tpu_custom_call.1} parent=0
    _
  %s5 = ssub.s32 1, %s3
  %s6 = scalar_select 0, %s5, %s3
  $region1: #{tpu_custom_call.1} parent=0
    #allocation2 [shape = 'u8[81920]{0}', space=vmem, size = 0x14000, scoped, tag = 'input window, operand 0']
    #allocation3 [shape = 's32[2]{0}', space=sflag, size = 0x8, scoped, tag = 'scoped memory for tpu_custom_call.1']
    #allocation4 [shape = 's32[2]{0}', space=sflag, size = 0x8, scoped, tag = 'scoped memory for tpu_custom_call.1']
    #allocation5 [shape = 'u8[16384]{0}', space=vmem, size = 0x4000, scoped, tag = 'input window, operand 1, single buffered']
    #allocation6 [shape = 's32[1]{0}', space=sflag, size = 0x4, scoped, tag = 'scoped memory for tpu_custom_call.1']
    #allocation7 [shape = 'u8[65536]{0}', space=vmem, size = 0x10000, scoped, tag = 'output window, operand 0']
    %7 = vsyncpa [#allocation3], 0
    %s8 = scalar_lea.sflag [#allocation3], 1
    %9 = vsyncpa %s8, 0
    %10 = vsyncpa [#allocation6], 0
    %11 = vsyncpa [#allocation4], 0
    %s12 = scalar_lea.sflag [#allocation4], 1
    %13 = vsyncpa %s12, 0
    loop: start=0, step=1, limit=4
    $region2: #{tpu_custom_call.1} parent=1 // loop_pre_header
      _
    $region3: #{tpu_custom_call.1} parent=1 // loop_header
      %s15 = sphi 0, %s19
      %p16 = scmp.ge.s32.totalorder %s15, 4
      %s25 = sphi 0, %s27
      %s28 = sphi 0, %s25
      %s29 = sphi 0, %s28
      %s45 = sphi 0, %s29
      %s49 = sphi 0, %s49
      %s51 = sphi 0, %s49
      %s52 = sphi 0, %s51
      %s66 = sphi 0, %s52
      %s72 = sphi 0, %s74
      %s75 = sphi 0, %s72
      %s76 = sphi 0, %s75
      %s92 = sphi 0, %s76
    $region4: #{tpu_custom_call.1} parent=1 // loop_header_branch
      %18 = sbr.rel (%p16) target = $region8
    $region5: #{tpu_custom_call.1} parent=1 // loop_body
      %s20 = ssub.s32 %s15, 1
      %s21 = ssub.s32 %s15, 2
      %s22 = sadd.s32 %s15, 1
      %s23 = ssub.s32 %s15, %s22
      %p24 = scmp.eq.s32.totalorder %s23, 0
      %s26 = sadd.s32 %s25, 1
      %s27 = scalar_select %p24, %s25, %s26
      %p30 = pneg %p24
      %p31 = scmp.eq.s32.totalorder %s15, 1
      %p32 = por %p30, %p31
      %p33 = scmp.ne.s32.totalorder %s25, %s28
      %p34 = scmp.eq.s32.totalorder %s15, 0
      %p35 = por %p33, %p34
      %p36 = scmp.ne.s32.totalorder %s25, %s28
      %p37 = scmp.eq.s32.totalorder %s20, 1
      %p38 = por %p36, %p37
      %p39 = scmp.ne.s32.totalorder %s28, %s29
      %p40 = scmp.eq.s32.totalorder %s20, 0
      %p41 = por %p39, %p40
      %p42 = scmp.ne.s32.totalorder %s28, %s29
      %p43 = scmp.eq.s32.totalorder %s21, 1
      %p44 = por %p42, %p43
      %p46 = scmp.ne.s32.totalorder %s29, %s45
      %p47 = scmp.eq.s32.totalorder %s21, 0
      %p48 = por %p46, %p47
      %s50 = sadd.s32 %s49, 1
      %p53 = scmp.eq.s32.totalorder %s15, 1
      %p54 = scmp.ne.s32.totalorder %s49, %s51
      %p55 = scmp.eq.s32.totalorder %s15, 0
      %p56 = por %p54, %p55
      %p57 = scmp.ne.s32.totalorder %s49, %s51
      %p58 = scmp.eq.s32.totalorder %s20, 1
      %p59 = por %p57, %p58
      %p60 = scmp.ne.s32.totalorder %s51, %s52
      %p61 = scmp.eq.s32.totalorder %s20, 0
      %p62 = por %p60, %p61
      %p63 = scmp.ne.s32.totalorder %s51, %s52
      %p64 = scmp.eq.s32.totalorder %s21, 1
      %p65 = por %p63, %p64
      %p67 = scmp.ne.s32.totalorder %s52, %s66
      %p68 = scmp.eq.s32.totalorder %s21, 0
      %p69 = por %p67, %p68
      %s70 = ssub.s32 %s15, %s22
      %p71 = scmp.eq.s32.totalorder %s70, 0
      %s73 = sadd.s32 %s72, 1
      %s74 = scalar_select %p71, %s72, %s73
      %p77 = pneg %p71
      %p78 = scmp.eq.s32.totalorder %s15, 1
      %p79 = por %p77, %p78
      %p80 = scmp.ne.s32.totalorder %s72, %s75
      %p81 = scmp.eq.s32.totalorder %s15, 0
      %p82 = por %p80, %p81
      %p83 = scmp.ne.s32.totalorder %s72, %s75
      %p84 = scmp.eq.s32.totalorder %s20, 1
      %p85 = por %p83, %p84
      %p86 = scmp.ne.s32.totalorder %s75, %s76
      %p87 = scmp.eq.s32.totalorder %s20, 0
      %p88 = por %p86, %p87
      %p89 = scmp.ne.s32.totalorder %s75, %s76
      %p90 = scmp.eq.s32.totalorder %s21, 1
      %p91 = por %p89, %p90
      %p93 = scmp.ne.s32.totalorder %s76, %s92
      %p94 = scmp.eq.s32.totalorder %s21, 0
      %p95 = por %p93, %p94
      %p96 = scmp.le.s32.totalorder 1, %s15
      %p97 = scmp.lt.s32.totalorder %s15, 3
      %p98 = pnand %p96, %p97
      %p99 = pneg %p98
      // Predicated region
      $region9: #{tpu_custom_call.1} parent=5 // pred_check
        _
      $region10: #{tpu_custom_call.1} parent=5 // pred_check_branch
        %101 = sbr.rel (%p98) target = $region12
      $region11: #{tpu_custom_call.1} parent=5 // pred_region
        %s102 = ssub.s32 %s15, 1
        // Predicated region
        $region13: #{tpu_custom_call.1} parent=11 // pred_check
          %p103 = pneg %p62
        $region14: #{tpu_custom_call.1} parent=11 // pred_check_branch
          %105 = sbr.rel (%p103) target = $region16
        $region15: #{tpu_custom_call.1} parent=11 // pred_region
          %s107 = ssub.s32 512, 512
          %108 = vsyncadd [#allocation6], %s107
          %s109 = sshll.u32 [#allocation5], 4
          %s110 = int_to_ptr.vmem [resolvable:$true] %s109
          %115 = dma.hbm_to_vmem [thread:$0]  %s1, 512, %s110, [#allocation6], 128, 128, 8
        $region16: #{tpu_custom_call.1} parent=11 // pred_fallthru
          _
      $region12: #{tpu_custom_call.1} parent=5 // pred_fallthru
        _
      %p116 = scmp.lt.s32.totalorder %s15, 2
      // Predicated region
      $region17: #{tpu_custom_call.1} parent=5 // pred_check
        %p117 = pneg %p116
      $region18: #{tpu_custom_call.1} parent=5 // pred_check_branch
        %119 = sbr.rel (%p117) target = $region20
      $region19: #{tpu_custom_call.1} parent=5 // pred_region
        // Predicated region
        $region21: #{tpu_custom_call.1} parent=19 // pred_check
          %p120 = pneg %p35
        $region22: #{tpu_custom_call.1} parent=19 // pred_check_branch
          %122 = sbr.rel (%p120) target = $region24
        $region23: #{tpu_custom_call.1} parent=19 // pred_region
          %s123 = sand.u32 %s25, 1
          %s124 = scalar_lea.sflag [#allocation3], %s123
          %s125 = sand.u32 %s25, 1
          %s126 = smul.addr %s125, 80
          %s127 = scalar_lea.vmem [#allocation2], %s126
          %s129 = ssub.s32 1280, 1280
          %130 = vsyncadd %s124, %s129
          %s131 = smul.addr %s15, 10
          %s132 = smul.addr %s131, 128
          %s133 = scalar_lea.hbm %s0, %s132
          %s134 = sshll.u32 %s127, 4
          %s135 = int_to_ptr.vmem [resolvable:$true] %s134
          %140 = dma.hbm_to_vmem [thread:$0]  %s133, 1280, %s135, %s124, 256, 256, 16
        $region24: #{tpu_custom_call.1} parent=19 // pred_fallthru
          _
      $region20: #{tpu_custom_call.1} parent=5 // pred_fallthru
        _
      %p141 = scmp.le.s32.totalorder 1, %s15
      %p142 = scmp.lt.s32.totalorder %s15, 3
      %p143 = pnand %p141, %p142
      %p144 = pneg %p143
      // Predicated region
      $region25: #{tpu_custom_call.1} parent=5 // pred_check
        _
      $region26: #{tpu_custom_call.1} parent=5 // pred_check_branch
        %146 = sbr.rel (%p143) target = $region28
      $region27: #{tpu_custom_call.1} parent=5 // pred_region
        %s147 = ssub.s32 %s15, 1
        %s148 = sand.u32 %s28, 1
        %s149 = scalar_lea.sflag [#allocation3], %s148
        %s150 = sand.u32 %s28, 1
        %s151 = smul.addr %s150, 80
        %s152 = scalar_lea.vmem [#allocation2], %s151
        // Predicated region
        $region29: #{tpu_custom_call.1} parent=27 // pred_check
          %p153 = pneg %p41
        $region30: #{tpu_custom_call.1} parent=27 // pred_check_branch
          %155 = sbr.rel (%p153) target = $region32
        $region31: #{tpu_custom_call.1} parent=27 // pred_region
          %156 = dma.done %s149, 1280
        $region32: #{tpu_custom_call.1} parent=27 // pred_fallthru
          _
        // Predicated region
        $region33: #{tpu_custom_call.1} parent=27 // pred_check
          %p157 = pneg %p62
        $region34: #{tpu_custom_call.1} parent=27 // pred_check_branch
          %159 = sbr.rel (%p157) target = $region36
        $region35: #{tpu_custom_call.1} parent=27 // pred_region
          %160 = dma.done [#allocation6], 512
        $region36: #{tpu_custom_call.1} parent=27 // pred_fallthru
          _
        %s161 = sand.u32 %s28, 1
        %s162 = scalar_lea.sflag [#allocation3], %s161
        %s163 = sand.u32 %s28, 1
        %s164 = smul.addr %s163, 80
        %s165 = scalar_lea.vmem [#allocation2], %s164
        %p166 = pneg %p41
        %p167 = pneg %p38
        %p168 = pneg %p62
        %p169 = pneg %p59
        %p170 = pneg %p88
        %p171 = pneg %p85
        %s172 = sand.u32 %s75, 1
        %s173 = scalar_lea.sflag [#allocation4], %s172
        %s174 = sand.u32 %s75, 1
        %s175 = smul.addr %s174, 64
        %s176 = scalar_lea.vmem [#allocation7], %s175
        %v177 = vld [vmem:[#allocation5] sm:$0xff]
        %v178 = vld [vmem:[#allocation5 + $0x8] sm:$0xff]
        %v179 = vld [vmem:[#allocation5 + $0x10] sm:$0xff]
        %v180 = vld [vmem:[#allocation5 + $0x18] sm:$0xff]
        %v181 = vld [vmem:[%s152] sm:$0xff]
        %v182 = vld [vmem:[%s152 + $0x8] sm:$0xff]
        %v183 = vld [vmem:[%s152 + $0x10] sm:$0xff]
        %v184 = vld [vmem:[%s152 + $0x18] sm:$0xff]
        %v185 = vld [vmem:[%s152 + $0x20] sm:$0xff]
        %v186 = vld [vmem:[%s152 + $0x28] sm:$0xff]
        %v187 = vld [vmem:[%s152 + $0x30] sm:$0xff]
        %v188 = vld [vmem:[%s152 + $0x38] sm:$0xff]
        %v189 = vld [vmem:[%s152 + $0x40] sm:$0xff]
        %v190 = vld [vmem:[%s152 + $0x48] sm:$0xff]
        %vm191 = vcmask 326656
        %v193 = vsel %vm191, %v177, 0
        %v196 = vsel %vm191, %v178, 0
        %v199 = vsel %vm191, %v179, 0
        %v202 = vsel %vm191, %v180, 0
        %204 = vmatprep.subr.mxu0 %v182
        %205 = vmatpush1.msra.mxu0 %v181
        %206 = vmatprep.subr.mxu0 %v184
        %207 = vmatpush1.msra.mxu0 %v183
        %208 = vmatprep.subr.mxu0 %v186
        %209 = vmatpush1.msra.mxu0 %v185
        %210 = vmatprep.subr.mxu0 %v188
        %211 = vmatpush1.msra.mxu0 %v187
        %212 = vmatprep.subr.mxu0 %v190
        %213 = vmatpush1.msra.mxu0 %v189
        %214 = vmatprep.subr.mxu0 0.0
        %215 = vmatpush1.msra.mxu0 0.0
        %216 = vmatprep.subr.mxu0 0.0
        %217 = vmatpush1.msra.mxu0 0.0
        %218 = vmatprep.subr.mxu0 0.0
        %219 = vmatpush1.msra.mxu0 0.0
        %220 = vmatprep.subr.mxu0 0.0
        %221 = vmatpush1.msra.mxu0 0.0
        %222 = vmatprep.subr.mxu0 0.0
        %223 = vmatpush1.msra.mxu0 0.0
        %224 = vmatprep.subr.mxu0 0.0
        %225 = vmatpush1.msra.mxu0 0.0
        %226 = vmatprep.subr.mxu0 0.0
        %227 = vmatpush1.msra.mxu0 0.0
        %228 = vmatprep.subr.mxu0 0.0
        %229 = vmatpush1.msra.mxu0 0.0
        %230 = vmatprep.subr.mxu0 0.0
        %231 = vmatpush1.msra.mxu0 0.0
        %232 = vmatprep.subr.mxu0 0.0
        %233 = vmatpush1.msra.mxu0 0.0
        %234 = vmatprep.subr.mxu0 0.0
        %235 = vmatpush1.msra.mxu0 0.0
        %236 = vmatprep.subr.mxu0 0.0
        %237 = vmatpush1.msra.mxu0 0.0
        %238 = vmatprep.subr.mxu0 0.0
        %239 = vmatpush1.msra.mxu0 0.0
        %240 = vmatprep.subr.mxu0 0.0
        %241 = vmatpush1.msra.mxu0 0.0
        %242 = vmatprep.subr.mxu0 0.0
        %243 = vmatpush1.msra.mxu0 0.0
        %244 = vmatprep.subr.mxu0 0.0
        %245 = vmatpush1.msra.mxu0 0.0
        %246 = vmatprep.subr.mxu0 0.0
        %247 = vmatpush1.msra.mxu0 0.0
        %248 = vmatprep.subr.mxu0 0.0
        %249 = vmatpush1.msra.mxu0 0.0
        %250 = vmatprep.subr.mxu0 0.0
        %251 = vmatpush1.msra.mxu0 0.0
        %252 = vmatprep.subr.mxu0 0.0
        %253 = vmatpush1.msra.mxu0 0.0
        %254 = vmatprep.subr.mxu0 0.0
        %255 = vmatpush1.msra.mxu0 0.0
        %256 = vmatprep.subr.mxu0 0.0
        %257 = vmatpush1.msra.mxu0 0.0
        %258 = vmatprep.subr.mxu0 0.0
        %259 = vmatpush1.msra.mxu0 0.0
        %260 = vmatprep.subr.mxu0 0.0
        %261 = vmatpush1.msra.mxu0 0.0
        %262 = vmatprep.subr.mxu0 0.0
        %263 = vmatpush1.msra.mxu0 0.0
        %264 = vmatprep.subr.mxu0 0.0
        %265 = vmatpush1.msra.mxu0 0.0
        %266 = vmatprep.subr.mxu0 0.0
        %267 = vmatpush1.msra.mxu0 0.0
        %268 = vmatprep.mubr.f32.mxu0 0.0
        %269 = vmatmul.mubr.f32.gmra.mrb[0].mxu0 %v193
        %v270 = vpop.f32.mrb[0].mxu0
        %v271 = vadd.f32 0.0, %v270
        %v272 = vpop.f32.mrb[0].mxu0
        %v273 = vadd.f32 0.0, %v272
        %274 = vmatprep.mubr.f32.mxu0 0.0
        %275 = vmatmul.mubr.f32.gmra.mrb[0].mxu0 %v196
        %v276 = vpop.f32.mrb[0].mxu0
        %v277 = vadd.f32 0.0, %v276
        %v278 = vpop.f32.mrb[0].mxu0
        %v279 = vadd.f32 0.0, %v278
        %280 = vmatprep.mubr.f32.mxu0 0.0
        %281 = vmatmul.mubr.f32.gmra.mrb[0].mxu0 %v199
        %v282 = vpop.f32.mrb[0].mxu0
        %v283 = vadd.f32 0.0, %v282
        %v284 = vpop.f32.mrb[0].mxu0
        %v285 = vadd.f32 0.0, %v284
        %286 = vmatprep.mubr.f32.mxu0 0.0
        %287 = vmatmul.mubr.f32.gmra.mrb[0].mxu0 %v202
        %v288 = vpop.f32.mrb[0].mxu0
        %v289 = vadd.f32 0.0, %v288
        %v290 = vpop.f32.mrb[0].mxu0
        %v291 = vadd.f32 0.0, %v290
        %292 = vdwg.mxu0
        %293 = vst [vmem:[%s176] sm:$0xff] %v271
        %294 = vst [vmem:[%s176 + $0x8] sm:$0xff] %v273
        %295 = vst [vmem:[%s176 + $0x10] sm:$0xff] %v277
        %296 = vst [vmem:[%s176 + $0x18] sm:$0xff] %v279
        %297 = vst [vmem:[%s176 + $0x20] sm:$0xff] %v283
        %298 = vst [vmem:[%s176 + $0x28] sm:$0xff] %v285
        %299 = vst [vmem:[%s176 + $0x30] sm:$0xff] %v289
        %300 = vst [vmem:[%s176 + $0x38] sm:$0xff] %v291
        %s301 = sand.u32 %s75, 1
        %s302 = scalar_lea.sflag [#allocation4], %s301
        %s303 = sand.u32 %s75, 1
        %s304 = smul.addr %s303, 64
        %s305 = scalar_lea.vmem [#allocation7], %s304
        // Predicated region
        $region37: #{tpu_custom_call.1} parent=27 // pred_check
          %p306 = pneg %p85
        $region38: #{tpu_custom_call.1} parent=27 // pred_check_branch
          %308 = sbr.rel (%p306) target = $region40
        $region39: #{tpu_custom_call.1} parent=27 // pred_region
          %s310 = ssub.s32 1024, 1024
          %311 = vsyncadd %s302, %s310
          %s312 = smul.addr %s20, 8
          %s313 = smul.addr %s312, 128
          %s314 = scalar_lea.hbm %s2, %s313
          %s315 = sshll.u32 %s305, 4
          %s316 = int_to_ptr.vmem [resolvable:$true] %s315
          %321 = dma.vmem_to_hbm [thread:$0]  %s316, 1024, %s314, %s302, 256, 256, 16
        $region40: #{tpu_custom_call.1} parent=27 // pred_fallthru
          _
      $region28: #{tpu_custom_call.1} parent=5 // pred_fallthru
        _
      %p322 = scmp.le.s32.totalorder 2, %s15
      // Predicated region
      $region41: #{tpu_custom_call.1} parent=5 // pred_check
        %p323 = pneg %p322
      $region42: #{tpu_custom_call.1} parent=5 // pred_check_branch
        %325 = sbr.rel (%p323) target = $region44
      $region43: #{tpu_custom_call.1} parent=5 // pred_region
        %s326 = ssub.s32 %s15, 2
        // Predicated region
        $region45: #{tpu_custom_call.1} parent=43 // pred_check
          %p327 = pneg %p91
        $region46: #{tpu_custom_call.1} parent=43 // pred_check_branch
          %329 = sbr.rel (%p327) target = $region48
        $region47: #{tpu_custom_call.1} parent=43 // pred_region
          %s330 = sand.u32 %s76, 1
          %s331 = scalar_lea.sflag [#allocation4], %s330
          %s332 = sand.u32 %s76, 1
          %s333 = smul.addr %s332, 64
          %s334 = scalar_lea.vmem [#allocation7], %s333
          %335 = dma.done %s331, 1024
        $region48: #{tpu_custom_call.1} parent=43 // pred_fallthru
          _
      $region44: #{tpu_custom_call.1} parent=5 // pred_fallthru
        _
    $region6: #{tpu_custom_call.1} parent=1 // loop_footer
      %s19 = sadd.s32 1, %s15
    $region7: #{tpu_custom_call.1} parent=1 // loop_footer_branch
      %14 = sbr.rel target = $region3
    $region8: #{tpu_custom_call.1} parent=1 // loop_exit
      _
    %336 = vsyncpa [#allocation3], 1
    %s337 = scalar_lea.sflag [#allocation3], 1
    %338 = vsyncpa %s337, 1
    %339 = vsyncpa [#allocation6], 1
    %340 = vsyncpa [#allocation4], 1
    %s341 = scalar_lea.sflag [#allocation4], 1
    %342 = vsyncpa %s341, 1

</llo_original>
